<compile_context>
chip_gen: v5e
topology: v5e:2x2
jax: 0.10.0
libtpu: 0.0.40
codegen_flags: <defaults>
</compile_context>

<pallas_src>
import jax
import jax.numpy as jnp
from jax.experimental import pallas as pl
from jax.experimental.pallas import tpu as pltpu


_LANES = 128              # vreg lane width: feature-dim padding unit (weights/outputs)
_SUBLANES = 8             # vreg sublane count: batch padding unit
_GRIDLESS_MAX_BATCH = 256 # below this, run a single fused VMEM-resident block
_TM_MAX = 1024            # max batch tile for the gridded (large-B) path


def _round_up(x, m):
    return ((x + m - 1) // m) * m


def _make_fused_mlp_kernel(n_layers, use_bf16):
    """Kernel body: h = relu(h @ W_i + b_i) for every layer, value-carried.

    Ref layout: (x_ref, w_0..w_{L-1}, b_0..b_{L-1}, o_ref).  No scratch: the
    intermediate activation lives in vregs / compiler-managed VMEM.
    """

    def kernel(*refs):
        x_ref = refs[0]
        w_refs = refs[1:1 + n_layers]
        b_refs = refs[1 + n_layers:1 + 2 * n_layers]
        o_ref = refs[1 + 2 * n_layers]

        h = x_ref[...]
        for i in range(n_layers):
            # bf16 MXU inputs (weights pre-cast at init), f32 accumulation.
            a = h.astype(jnp.bfloat16) if use_bf16 else h
            y = jnp.dot(a, w_refs[i][...], preferred_element_type=jnp.float32)
            h = jnp.maximum(y + b_refs[i][...], 0.0)      # gate = ReLU, bias in f32
        o_ref[...] = h.astype(o_ref.dtype)

    return kernel


class FCBodyPallas:
    """JAX/Pallas equivalent of regym FCBody(state_dim, hidden_units, gate=relu)."""

    def __init__(self, state_dim, hidden_units=(64, 64), key=None,
                 use_bf16_matmul=False):
        if not isinstance(hidden_units, tuple):
            hidden_units = tuple(hidden_units)
        if isinstance(state_dim, int):
            dims = (state_dim,) + hidden_units
        else:
            dims = tuple(state_dim) + hidden_units
        self.dims = dims
        self.feature_dim = dims[-1]
        # bf16 MXU inputs are the recommended default for non-toy hidden sizes
        # on v6e/v7x; kept opt-in here so the f32 self-test tolerance holds.
        self.use_bf16_matmul = use_bf16_matmul

        # Layer i contracts over: true input width (layer 0) or the previous
        # layer's padded output width.  Outputs are padded to 128 lanes.
        out_pads = tuple(_round_up(d, _LANES) for d in dims[1:])
        in_pads = (dims[0],) + out_pads[:-1]
        self.out_pads = out_pads

        if key is None:
            key = jax.random.PRNGKey(0)

        w_dtype = jnp.bfloat16 if use_bf16_matmul else jnp.float32

        # Deterministic synthetic init.
        # TODO(synk): regym's layer_init uses orthogonal weight init; we use
        # scaled-normal weights as a deterministic synthetic parameterization.
        self.params = []   # true (w, b) in f32 for the pure-JAX reference
        self.w_pad = []    # lane-padded weights (bf16 pre-cast if requested)
        self.b_pad = []    # lane-padded (1, p_out) f32 biases
        for li, (d_in, d_out) in enumerate(zip(dims[:-1], dims[1:])):
            key, wk, bk = jax.random.split(key, 3)
            scale = 1.0 / jnp.sqrt(jnp.float32(d_in))
            w = jax.random.normal(wk, (d_in, d_out), dtype=jnp.float32) * scale
            b = 0.1 * jax.random.normal(bk, (d_out,), dtype=jnp.float32)
            self.params.append((w, b))

            p_in, p_out = in_pads[li], out_pads[li]
            wp = jnp.zeros((p_in, p_out), dtype=w_dtype)
            wp = wp.at[:d_in, :d_out].set(w.astype(w_dtype))
            bp = jnp.zeros((1, p_out), dtype=jnp.float32)
            bp = bp.at[0, :d_out].set(b)
            self.w_pad.append(wp)
            self.b_pad.append(bp)

    def __call__(self, x):
        B, d0 = x.shape
        assert d0 == self.dims[0]
        n_layers = len(self.w_pad)
        p_last = self.out_pads[-1]
        x = x.astype(jnp.float32)

        # Batch handling: tiny batches run gridless (single VMEM-resident
        # block, batch rounded to a sublane multiple); big batches get a
        # batch-tiled "parallel" grid with the tile capped so there are always
        # >= 2 tiles (both v7x TensorCores get work).
        if B <= _GRIDLESS_MAX_BATCH:
            tm = None
            b_pad = _round_up(max(B, 1), _SUBLANES)
        else:
            tm = min(_TM_MAX, _round_up((B + 1) // 2, _SUBLANES))
            b_pad = _round_up(B, tm)

        if b_pad != B:
            x = jnp.pad(x, ((0, b_pad - B), (0, 0)))

        kernel = _make_fused_mlp_kernel(n_layers, self.use_bf16_matmul)
        out_shape = jax.ShapeDtypeStruct((b_pad, p_last), jnp.float32)
        operands = (x,) + tuple(self.w_pad) + tuple(self.b_pad)

        if tm is None:
            # Single fused block: no grid, no pipeline bookkeeping, everything
            # VMEM-resident for the one invocation.
            vmem = pl.BlockSpec(memory_space=pltpu.MemorySpace.VMEM)
            out = pl.pallas_call(
                kernel,
                out_shape=out_shape,
                in_specs=[vmem] * len(operands),
                out_specs=vmem,
            )(*operands)
        else:
            # Batch-tiled grid: weights/biases stay VMEM-resident (block index
            # (0, 0) every step); the batch axis is "parallel" so v7x's two
            # TensorCores split the tiles.
            in_specs = [pl.BlockSpec((tm, d0), lambda i: (i, 0))]
            for w in self.w_pad:
                in_specs.append(pl.BlockSpec(w.shape, lambda i: (0, 0)))
            for b in self.b_pad:
                in_specs.append(pl.BlockSpec(b.shape, lambda i: (0, 0)))
            out = pl.pallas_call(
                kernel,
                out_shape=out_shape,
                grid=(b_pad // tm,),
                in_specs=in_specs,
                out_specs=pl.BlockSpec((tm, p_last), lambda i: (i, 0)),
                compiler_params=pltpu.CompilerParams(
                    dimension_semantics=("parallel",)),
            )(*operands)

        # TODO(synk): consumers that can accept the padded (b_pad, 128) slab
        # should take `out` directly; this slice is an extra HBM copy kept
        # only to match FCBody's exact output shape.
        return out[:B, :self.feature_dim]

    def get_feature_shape(self):
        return self.feature_dim


def _reference_forward(x, params, use_bf16=False):
    h = x.astype(jnp.float32)
    for w, b in params:
        if use_bf16:
            y = jnp.dot(h.astype(jnp.bfloat16), w.astype(jnp.bfloat16),
                        preferred_element_type=jnp.float32)
        else:
            y = h @ w
        h = jnp.maximum(y + b, 0.0)
    return h


if __name__ == "__main__":
    key = jax.random.PRNGKey(0)
    key, xk_small, xk_big = jax.random.split(key, 3)

    batch = 2
    state_dim = 32
    hidden_units = (64, 64)

    body = FCBodyPallas(state_dim, hidden_units, key=key)

    # Small-batch path: single gridless fused kernel (f32).
    x_small = jax.random.normal(xk_small, (batch, state_dim), dtype=jnp.float32)
    out_small = jax.block_until_ready(body(x_small))
    ref_small = _reference_forward(x_small, body.params)
    assert out_small.shape == (batch, hidden_units[-1])
    assert jnp.allclose(out_small, ref_small, atol=1e-4, rtol=1e-4), \
        "small-batch mismatch vs reference"

    # Larger batch exercises the batch-tiled "parallel" grid path (2 tiles).
    big_batch = 512
    x_big = jax.random.normal(xk_big, (big_batch, state_dim), dtype=jnp.float32)
    out_big = jax.block_until_ready(body(x_big))
    ref_big = _reference_forward(x_big, body.params)
    assert out_big.shape == (big_batch, hidden_units[-1])
    assert jnp.allclose(out_big, ref_big, atol=1e-4, rtol=1e-4), \
        "big-batch mismatch vs reference"

    # bf16 MXU path (pre-cast bf16 weights, f32 accumulation, f32 bias) --
    # the recommended configuration for non-toy hidden sizes on v6e/v7x --
    # checked against a reference that uses the same bf16 operand precision.
    body_bf16 = FCBodyPallas(state_dim, hidden_units,
                             key=jax.random.PRNGKey(0), use_bf16_matmul=True)
    out_bf16 = jax.block_until_ready(body_bf16(x_big))
    ref_bf16 = _reference_forward(x_big, body_bf16.params, use_bf16=True)
    assert out_bf16.shape == (big_batch, hidden_units[-1])
    assert jnp.allclose(out_bf16, ref_bf16, atol=1e-3, rtol=1e-3), \
        "bf16-path mismatch vs bf16 reference"

    print("KERNEL_OK")
</pallas_src>

<mosaic_0001>
module attributes {stable_mosaic.version = 11 : i64} {
  func.func @kernel(%arg0: memref<8x32xf32, #tpu.memory_space<vmem>>, %arg1: memref<32x128xf32, #tpu.memory_space<vmem>>, %arg2: memref<128x128xf32, #tpu.memory_space<vmem>>, %arg3: memref<1x128xf32, #tpu.memory_space<vmem>>, %arg4: memref<1x128xf32, #tpu.memory_space<vmem>>, %arg5: memref<8x128xf32, #tpu.memory_space<vmem>>) attributes {dimension_semantics = [], scalar_prefetch = 0 : i64, scratch_operands = 0 : i64, tpu.core_type = #tpu.core_type<tc>} {
    %c0 = arith.constant 0 : index
    %c0_0 = arith.constant 0 : index
    %0 = vector.load %arg0[%c0, %c0_0] : memref<8x32xf32, #tpu.memory_space<vmem>>, vector<8x32xf32>
    %c0_1 = arith.constant 0 : index
    %c0_2 = arith.constant 0 : index
    %1 = vector.load %arg1[%c0_1, %c0_2] : memref<32x128xf32, #tpu.memory_space<vmem>>, vector<32x128xf32>
    %cst = arith.constant dense<0.000000e+00> : vector<8x128xf32>
    %2 = tpu.matmul %0, %1, %cst {dimension_numbers = #tpu.dot_dimension_numbers<[1], [0], [0], [1], [0, 0, 1, 1], [], []>} : vector<8x32xf32>, vector<32x128xf32>, vector<8x128xf32> -> vector<8x128xf32>
    %c0_3 = arith.constant 0 : index
    %c0_4 = arith.constant 0 : index
    %3 = vector.load %arg3[%c0_3, %c0_4] : memref<1x128xf32, #tpu.memory_space<vmem>>, vector<1x128xf32>
    %4 = vector.broadcast %3 : vector<1x128xf32> to vector<8x128xf32>
    %5 = arith.addf %2, %4 : vector<8x128xf32>
    %cst_5 = arith.constant 0.000000e+00 : f32
    %6 = vector.broadcast %cst_5 : f32 to vector<8x128xf32>
    %7 = arith.maximumf %5, %6 : vector<8x128xf32>
    %c0_6 = arith.constant 0 : index
    %c0_7 = arith.constant 0 : index
    %8 = vector.load %arg2[%c0_6, %c0_7] : memref<128x128xf32, #tpu.memory_space<vmem>>, vector<128x128xf32>
    %cst_8 = arith.constant dense<0.000000e+00> : vector<8x128xf32>
    %9 = tpu.matmul %7, %8, %cst_8 {dimension_numbers = #tpu.dot_dimension_numbers<[1], [0], [0], [1], [0, 0, 1, 1], [], []>} : vector<8x128xf32>, vector<128x128xf32>, vector<8x128xf32> -> vector<8x128xf32>
    %c0_9 = arith.constant 0 : index
    %c0_10 = arith.constant 0 : index
    %10 = vector.load %arg4[%c0_9, %c0_10] : memref<1x128xf32, #tpu.memory_space<vmem>>, vector<1x128xf32>
    %11 = vector.broadcast %10 : vector<1x128xf32> to vector<8x128xf32>
    %12 = arith.addf %9, %11 : vector<8x128xf32>
    %cst_11 = arith.constant 0.000000e+00 : f32
    %13 = vector.broadcast %cst_11 : f32 to vector<8x128xf32>
    %14 = arith.maximumf %12, %13 : vector<8x128xf32>
    %c0_12 = arith.constant 0 : index
    %c0_13 = arith.constant 0 : index
    %15 = vector.load %arg5[%c0_12, %c0_13] : memref<8x128xf32, #tpu.memory_space<vmem>>, vector<8x128xf32>
    tpu.vector_store %arg5[%c0_12, %c0_13], %14 {strides = array<i32>} : memref<8x128xf32, #tpu.memory_space<vmem>>, vector<8x128xf32>,
    return
  }
}

</mosaic_0001>

<llo_original>
// kernel: tpu_custom_call.1
$region0: #{tpu_custom_call.1}
  #allocation0 [shape = 'u32[]', space=smem, size = 0x4, offset = 0x4, fixed_abs, tag = 'smem constant byte address 0x4 - core index']
  #allocation1 [shape = 'u32[72,128]{1,0:T(1,128)}', space=vmem, size = 0x9000, scoped, tag = 'internal scratch']
  %s0 = inlined_call_operand.hbm [shape: f32[8,32], index: 0, kind: input, shape index: {}]
  %s1 = inlined_call_operand.hbm [shape: f32[32,128], index: 1, kind: input, shape index: {}]
  %s2 = inlined_call_operand.hbm [shape: f32[128,128], index: 2, kind: input, shape index: {}]
  %s3 = inlined_call_operand.vmem [shape: f32[1,128], index: 3, kind: input, shape index: {}]
  %s4 = inlined_call_operand.vmem [shape: f32[1,128], index: 4, kind: input, shape index: {}]
  %s5 = inlined_call_operand.hbm [shape: f32[8,128], index: 5, kind: output, shape index: {}]
  %s6 = sld [smem:[#allocation0]]
  $region42: #{tpu_custom_call.1} parent=0
    _
  %s8 = ssub.s32 1, %s6
  %s9 = scalar_select 0, %s8, %s6
  $region1: #{tpu_custom_call.1} parent=0
    #allocation2 [shape = 'u8[4096]{0}', space=vmem, size = 0x1000, scoped, tag = 'input window, operand 0, single buffered']
    #allocation3 [shape = 's32[1]{0}', space=sflag, size = 0x4, scoped, tag = 'scoped memory for tpu_custom_call.1']
    #allocation4 [shape = 's32[1]{0}', space=sflag, size = 0x4, scoped, tag = 'scoped memory for tpu_custom_call.1']
    #allocation5 [shape = 'u8[16384]{0}', space=vmem, size = 0x4000, scoped, tag = 'input window, operand 1, single buffered']
    #allocation6 [shape = 's32[1]{0}', space=sflag, size = 0x4, scoped, tag = 'scoped memory for tpu_custom_call.1']
    #allocation7 [shape = 'u8[65536]{0}', space=vmem, size = 0x10000, scoped, tag = 'input window, operand 2, single buffered']
    #allocation8 [shape = 'u8[4096]{0}', space=vmem, size = 0x1000, scoped, tag = 'output window, operand 0, single buffered']
    %10 = vsyncpa [#allocation3], 0
    %11 = vsyncpa [#allocation6], 0
    %12 = vsyncpa [#allocation4], 0
    // Predicated region
    $region2: #{tpu_custom_call.1} parent=1 // pred_check
      _
    $region3: #{tpu_custom_call.1} parent=1 // pred_check_branch
      %14 = sbr.rel (0) target = $region5
    $region4: #{tpu_custom_call.1} parent=1 // pred_region
      %16 = vsyncadd [#allocation3], 0
      %s18 = sshll.u32 %s0, 4
      %s19 = int_to_ptr.hbm [resolvable:$true] %s18
      %s20 = sshll.u32 [#allocation2], 4
      %s21 = int_to_ptr.vmem [resolvable:$true] %s20
      %23 = dma.hbm_to_vmem [thread:$0]  %s19, 128, %s21, [#allocation3]
    $region5: #{tpu_custom_call.1} parent=1 // pred_fallthru
      _
    // Predicated region
    $region6: #{tpu_custom_call.1} parent=1 // pred_check
      _
    $region7: #{tpu_custom_call.1} parent=1 // pred_check_branch
      %25 = sbr.rel (0) target = $region9
    $region8: #{tpu_custom_call.1} parent=1 // pred_region
      %27 = vsyncadd [#allocation6], 0
      %s28 = sshll.u32 %s1, 4
      %s29 = int_to_ptr.hbm [resolvable:$true] %s28
      %s30 = sshll.u32 [#allocation5], 4
      %s31 = int_to_ptr.vmem [resolvable:$true] %s30
      %36 = dma.hbm_to_vmem [thread:$0]  %s29, 512, %s31, [#allocation6], 128, 128, 8
    $region9: #{tpu_custom_call.1} parent=1 // pred_fallthru
      _
    // Predicated region
    $region10: #{tpu_custom_call.1} parent=1 // pred_check
      _
    $region11: #{tpu_custom_call.1} parent=1 // pred_check_branch
      %38 = sbr.rel (0) target = $region13
    $region12: #{tpu_custom_call.1} parent=1 // pred_region
      %40 = vsyncadd [#allocation6], 0
      %s41 = sshll.u32 %s2, 4
      %s42 = int_to_ptr.hbm [resolvable:$true] %s41
      %s43 = sshll.u32 [#allocation7], 4
      %s44 = int_to_ptr.vmem [resolvable:$true] %s43
      %49 = dma.hbm_to_vmem [thread:$0]  %s42, 2048, %s44, [#allocation6], 128, 128, 8
    $region13: #{tpu_custom_call.1} parent=1 // pred_fallthru
      _
    // Predicated region
    $region14: #{tpu_custom_call.1} parent=1 // pred_check
      _
    $region15: #{tpu_custom_call.1} parent=1 // pred_check_branch
      %51 = sbr.rel (0) target = $region17
    $region16: #{tpu_custom_call.1} parent=1 // pred_region
      _
    $region17: #{tpu_custom_call.1} parent=1 // pred_fallthru
      _
    // Predicated region
    $region18: #{tpu_custom_call.1} parent=1 // pred_check
      _
    $region19: #{tpu_custom_call.1} parent=1 // pred_check_branch
      %53 = sbr.rel (0) target = $region21
    $region20: #{tpu_custom_call.1} parent=1 // pred_region
      _
    $region21: #{tpu_custom_call.1} parent=1 // pred_fallthru
      _
    // Predicated region
    $region22: #{tpu_custom_call.1} parent=1 // pred_check
      _
    $region23: #{tpu_custom_call.1} parent=1 // pred_check_branch
      %55 = sbr.rel (0) target = $region25
    $region24: #{tpu_custom_call.1} parent=1 // pred_region
      %57 = dma.done [#allocation3], 128
    $region25: #{tpu_custom_call.1} parent=1 // pred_fallthru
      _
    // Predicated region
    $region26: #{tpu_custom_call.1} parent=1 // pred_check
      _
    $region27: #{tpu_custom_call.1} parent=1 // pred_check_branch
      %59 = sbr.rel (0) target = $region29
    $region28: #{tpu_custom_call.1} parent=1 // pred_region
      %61 = dma.done [#allocation6], 512
    $region29: #{tpu_custom_call.1} parent=1 // pred_fallthru
      _
    // Predicated region
    $region30: #{tpu_custom_call.1} parent=1 // pred_check
      _
    $region31: #{tpu_custom_call.1} parent=1 // pred_check_branch
      %63 = sbr.rel (0) target = $region33
    $region32: #{tpu_custom_call.1} parent=1 // pred_region
      %65 = dma.done [#allocation6], 2048
    $region33: #{tpu_custom_call.1} parent=1 // pred_fallthru
      _
    %v66 = vld [vmem:[#allocation2] sm:$0xff]
    %v67 = vld [vmem:[#allocation5] sm:$0xff]
    %v68 = vld [vmem:[#allocation5 + $0x8] sm:$0xff]
    %v69 = vld [vmem:[#allocation5 + $0x10] sm:$0xff]
    %v70 = vld [vmem:[#allocation5 + $0x18] sm:$0xff]
    %v71 = vld [vmem:[%s3] sm:$0x1]
    %v73 = vperm.slane %v71, 0
    %vm75 = vcmask 261120
    %v77 = vsel %vm75, %v66, 0
    %79 = vmatpush.msra.mxu0 0.0
    %80 = vmatpush.msra.mxu0 0.0
    %81 = vmatpush.msra.mxu0 0.0
    %82 = vmatpush.msra.mxu0 0.0
    %83 = vmatpush.msra.mxu0 0.0
    %84 = vmatpush.msra.mxu0 0.0
    %85 = vmatpush.msra.mxu0 0.0
    %86 = vmatpush.msra.mxu0 0.0
    %87 = vmatpush.msra.mxu0 0.0
    %88 = vmatpush.msra.mxu0 0.0
    %89 = vmatpush.msra.mxu0 0.0
    %90 = vmatpush.msra.mxu0 0.0
    %91 = vmatpush.msra.mxu0 %v70
    %92 = vmatpush.msra.mxu0 %v69
    %93 = vmatpush.msra.mxu0 %v68
    %94 = vmatpush.msra.mxu0 %v67
    %95 = vmatmul.f32.gmra.mxu0 %v77
    %v96 = vpop.f32.mrf.mxu0
    %v97 = vadd.f32 %v73, %v96
    %98 = vdwg.mxu0
    %v99 = vmax.f32 %v97, 0.0
    %v100 = vld [vmem:[#allocation7] sm:$0xff]
    %v101 = vld [vmem:[#allocation7 + $0x8] sm:$0xff]
    %v102 = vld [vmem:[#allocation7 + $0x10] sm:$0xff]
    %v103 = vld [vmem:[#allocation7 + $0x18] sm:$0xff]
    %v104 = vld [vmem:[#allocation7 + $0x20] sm:$0xff]
    %v105 = vld [vmem:[#allocation7 + $0x28] sm:$0xff]
    %v106 = vld [vmem:[#allocation7 + $0x30] sm:$0xff]
    %v107 = vld [vmem:[#allocation7 + $0x38] sm:$0xff]
    %v108 = vld [vmem:[#allocation7 + $0x40] sm:$0xff]
    %v109 = vld [vmem:[#allocation7 + $0x48] sm:$0xff]
    %v110 = vld [vmem:[#allocation7 + $0x50] sm:$0xff]
    %v111 = vld [vmem:[#allocation7 + $0x58] sm:$0xff]
    %v112 = vld [vmem:[#allocation7 + $0x60] sm:$0xff]
    %v113 = vld [vmem:[#allocation7 + $0x68] sm:$0xff]
    %v114 = vld [vmem:[#allocation7 + $0x70] sm:$0xff]
    %v115 = vld [vmem:[#allocation7 + $0x78] sm:$0xff]
    %v116 = vld [vmem:[%s4] sm:$0x1]
    %v118 = vperm.slane %v116, 0
    %120 = vmatpush.msra.mxu0 %v115
    %121 = vmatpush.msra.mxu0 %v114
    %122 = vmatpush.msra.mxu0 %v113
    %123 = vmatpush.msra.mxu0 %v112
    %124 = vmatpush.msra.mxu0 %v111
    %125 = vmatpush.msra.mxu0 %v110
    %126 = vmatpush.msra.mxu0 %v109
    %127 = vmatpush.msra.mxu0 %v108
    %128 = vmatpush.msra.mxu0 %v107
    %129 = vmatpush.msra.mxu0 %v106
    %130 = vmatpush.msra.mxu0 %v105
    %131 = vmatpush.msra.mxu0 %v104
    %132 = vmatpush.msra.mxu0 %v103
    %133 = vmatpush.msra.mxu0 %v102
    %134 = vmatpush.msra.mxu0 %v101
    %135 = vmatpush.msra.mxu0 %v100
    %136 = vmatmul.f32.gmra.mxu0 %v99
    %v137 = vpop.f32.mrf.mxu0
    %v138 = vadd.f32 %v118, %v137
    %139 = vdwg.mxu0
    %v140 = vmax.f32 %v138, 0.0
    %141 = vst [vmem:[#allocation8] sm:$0xff] %v140
    // Predicated region
    $region34: #{tpu_custom_call.1} parent=1 // pred_check
      _
    $region35: #{tpu_custom_call.1} parent=1 // pred_check_branch
      %143 = sbr.rel (0) target = $region37
    $region36: #{tpu_custom_call.1} parent=1 // pred_region
      %145 = vsyncadd [#allocation4], 0
      %s147 = sshll.u32 [#allocation8], 4
      %s148 = int_to_ptr.vmem [resolvable:$true] %s147
      %s149 = sshll.u32 %s5, 4
      %s150 = int_to_ptr.hbm [resolvable:$true] %s149
      %152 = dma.vmem_to_hbm [thread:$0]  %s148, 128, %s150, [#allocation4]
    $region37: #{tpu_custom_call.1} parent=1 // pred_fallthru
      _
    // Predicated region
    $region38: #{tpu_custom_call.1} parent=1 // pred_check
      _
    $region39: #{tpu_custom_call.1} parent=1 // pred_check_branch
      %154 = sbr.rel (0) target = $region41
    $region40: #{tpu_custom_call.1} parent=1 // pred_region
      %156 = dma.done [#allocation4], 128
    $region41: #{tpu_custom_call.1} parent=1 // pred_fallthru
      _
    %157 = vsyncpa [#allocation3], 1
    %158 = vsyncpa [#allocation6], 1
    %159 = vsyncpa [#allocation4], 1

</llo_original>
